<compile_context>
chip_gen: v6e
topology: v6e:2x2x1
jax: 0.10.0
libtpu: 0.0.40
codegen_flags: <defaults>
</compile_context>

<pallas_src>
import math

import jax
import jax.numpy as jnp
from jax.experimental import pallas as pl
from jax.experimental.pallas import tpu as pltpu


_LANE = 128


def _round_up(n, m):
    return ((n + m - 1) // m) * m


def _make_fused_decoder_kernel(num_layers):
    """Whole MLP applied to one (TM, d_in) batch tile.

    Refs: (x, w1, b1, ..., wN, bN, out).  Weights/biases are full arrays
    (VMEM-resident across grid steps via constant index_maps)."""

    def kernel(x_ref, *refs):
        o_ref = refs[-1]
        h = x_ref[...]
        for i in range(num_layers):
            w = refs[2 * i][...]
            b = refs[2 * i + 1][...]
            # MXU matmul with f32 accumulation; bias add + ReLU stay in f32
            # (v5e VPU has no bf16 ALUs, so this is the safe path everywhere).
            acc = jnp.dot(h, w, preferred_element_type=jnp.float32)
            acc = acc + b.astype(jnp.float32)
            h = jnp.maximum(acc, 0.0)
            if i + 1 < num_layers:
                # Feed the next MXU pass in the weight dtype (bf16-native on
                # v5e/v6e/v7x when params are bf16; no-op for f32 params).
                h = h.astype(w.dtype)
        o_ref[...] = h.astype(o_ref.dtype)

    return kernel


def decoder_forward(x, params, *, tile_m=256, out_dtype=None):
    """Fused Decoder forward: relu(...relu(relu(x@W1+b1)@W2+b2)...).

    params: list of (w, b) with w shaped (in, out) and b shaped (1, out) or (out,).
    tile_m: batch tile feeding the MXU M dimension (256 for v6e/v7x, 128 for v5e).
    """
    batch, d_in = x.shape
    num_layers = len(params)
    assert params[0][0].shape[0] == d_in
    d_out_final = params[-1][0].shape[1]
    if out_dtype is None:
        out_dtype = x.dtype

    param_dtype = params[0][0].dtype
    itemsize = jnp.dtype(param_dtype).itemsize
    out_itemsize = jnp.dtype(out_dtype).itemsize
    # bf16 activations pack two rows per sublane -> pad batch tiles to 16.
    sublane = 16 if itemsize == 2 else 8

    # Batch tile: fill the MXU when the batch is large, but never blow a tiny
    # batch up to a full 256-row tile.
    tm = min(tile_m, max(sublane, _round_up(batch, sublane)))
    b_pad = _round_up(max(batch, tm), tm)
    grid = (b_pad // tm,)

    # Cast activations onto the MXU-native parameter dtype; pad batch rows and
    # input lanes with zeros (exact: zero rows are sliced off, zero input
    # columns hit zero weight rows below).
    d_in_pad = _round_up(d_in, _LANE)
    x = x.astype(param_dtype)
    x = jnp.pad(x, ((0, b_pad - batch), (0, d_in_pad - d_in)))

    # Lane-pad weights/biases to 128 multiples so every matmul operand, the
    # intermediate activations, and the output stores are lane-dense.
    # (For repeated inference, hoist this padding out and reuse the padded
    # params; it is a handful of tiny XLA pads here.)
    flat_params = []
    dims = [d_in_pad]
    flops = 0
    param_bytes = 0
    for w, b in params:
        di, do = w.shape
        di_p, do_p = _round_up(di, _LANE), _round_up(do, _LANE)
        w_p = jnp.pad(w, ((0, di_p - di), (0, do_p - do)))
        b_p = jnp.pad(jnp.reshape(b, (1, -1)).astype(param_dtype),
                      ((0, 0), (0, do_p - do)))
        flat_params.extend((w_p, b_p))
        dims.append(do_p)
        flops += 2 * b_pad * di_p * do_p
        param_bytes += (w_p.size + b_p.size) * itemsize
    d_out_pad = dims[-1]

    # BlockSpecs: batch-tiled activations, VMEM-resident (replicated) params.
    in_specs = [pl.BlockSpec((tm, d_in_pad), lambda i: (i, 0))]
    for li in range(num_layers):
        di_p, do_p = dims[li], dims[li + 1]
        in_specs.append(pl.BlockSpec((di_p, do_p), lambda i: (0, 0)))
        in_specs.append(pl.BlockSpec((1, do_p), lambda i: (0, 0)))
    out_specs = pl.BlockSpec((tm, d_out_pad), lambda i: (i, 0))

    # VMEM budget guard (budget against v7x's 64 MiB physical VMEM).
    vmem_needed = (
        2 * param_bytes                       # params (double-buffer bound)
        + 2 * tm * d_in_pad * itemsize        # x tile double buffer
        + 2 * tm * d_out_pad * out_itemsize   # out tile double buffer
        + 4 * tm * sum(dims)                  # f32 intermediates / accum headroom
    )
    vmem_limit = None
    if vmem_needed > 32 * 1024 * 1024:
        # TODO(synk): if this approaches ~64 MiB (v7x physical VMEM), tile the
        # widest layer's N dimension with an extra grid axis instead of just
        # raising the limit.
        vmem_limit = min(int(vmem_needed * 1.25), 100 * 1024 * 1024)

    bytes_accessed = (
        b_pad * d_in_pad * itemsize
        + b_pad * d_out_pad * out_itemsize
        + param_bytes
    )

    out = pl.pallas_call(
        _make_fused_decoder_kernel(num_layers),
        out_shape=jax.ShapeDtypeStruct((b_pad, d_out_pad), out_dtype),
        grid=grid,
        in_specs=in_specs,
        out_specs=out_specs,
        compiler_params=pltpu.CompilerParams(
            dimension_semantics=("parallel",),   # v7x: split batch across 2 TCs
            vmem_limit_bytes=vmem_limit,
        ),
        cost_estimate=pl.CostEstimate(
            flops=flops, transcendentals=0, bytes_accessed=bytes_accessed
        ),
    )(x, *flat_params)

    return out[:batch, :d_out_final]


def init_decoder_params(key, layer_sizes, dtype=jnp.float32):
    """Deterministic init matching weights_init:
       bias = 0, weight ~ xavier_uniform(gain=0.5).
       Weights stored as (in, out) == PyTorch weight.T (same distribution,
       since the xavier bound is symmetric in fan_in/fan_out); biases stored
       pre-shaped (1, out)."""
    params = []
    gain = 0.5
    for i in range(len(layer_sizes) - 1):
        fan_in, fan_out = layer_sizes[i], layer_sizes[i + 1]
        key, sub = jax.random.split(key)
        bound = gain * math.sqrt(6.0 / (fan_in + fan_out))
        w = jax.random.uniform(
            sub, (fan_in, fan_out), dtype=jnp.float32, minval=-bound, maxval=bound
        ).astype(dtype)
        b = jnp.zeros((1, fan_out), dtype=dtype)
        params.append((w, b))
    return params


if __name__ == "__main__":
    key = jax.random.PRNGKey(0)
    layer_sizes = (32, 64, 128)          # Decoder([32, 64, 128])
    batch = 2

    k_x, k_p = jax.random.split(key)
    x = jax.random.normal(k_x, (batch, layer_sizes[0]), dtype=jnp.float32)
    params = init_decoder_params(k_p, layer_sizes, dtype=jnp.float32)

    # Plain-JAX reference of the exact module math (f32).
    ref = x
    for w, b in params:
        ref = jnp.maximum(ref @ w + b, 0.0)

    fwd = jax.jit(decoder_forward)

    # f32 path — strict check.
    out_f32 = jax.block_until_ready(fwd(x, params))
    assert out_f32.shape == (batch, layer_sizes[-1])
    assert jnp.allclose(out_f32, ref, atol=1e-5, rtol=1e-5)

    # bf16 weights/activations (native MXU path on v5e/v6e/v7x) — loose check.
    params_bf16 = jax.tree_util.tree_map(
        lambda p: p.astype(jnp.bfloat16), params
    )
    out_bf16 = jax.block_until_ready(fwd(x, params_bf16))
    assert out_bf16.shape == (batch, layer_sizes[-1])
    assert jnp.allclose(out_bf16.astype(jnp.float32), ref, atol=5e-2, rtol=5e-2)

    print("KERNEL_OK")
</pallas_src>

<mosaic_0001>
module attributes {stable_mosaic.version = 11 : i64} {
  func.func @kernel(%arg0: i32, %arg1: memref<8x128xf32, #tpu.memory_space<vmem>>, %arg2: memref<128x128xf32, #tpu.memory_space<vmem>>, %arg3: memref<1x128xf32, #tpu.memory_space<vmem>>, %arg4: memref<128x128xf32, #tpu.memory_space<vmem>>, %arg5: memref<1x128xf32, #tpu.memory_space<vmem>>, %arg6: memref<8x128xf32, #tpu.memory_space<vmem>>) attributes {dimension_semantics = [#tpu.dimension_semantics<parallel>], iteration_bounds = array<i64: 1>, scalar_prefetch = 0 : i64, scratch_operands = 0 : i64, tpu.core_type = #tpu.core_type<tc>, window_params = [{transform_indices = @transform_0, window_bounds = array<i64: 8, 128>}, {pipeline_mode = #tpu.pipeline_mode<synchronous>, transform_indices = @transform_1, window_bounds = array<i64: 128, 128>}, {pipeline_mode = #tpu.pipeline_mode<synchronous>, transform_indices = @transform_2, window_bounds = array<i64: 1, 128>}, {pipeline_mode = #tpu.pipeline_mode<synchronous>, transform_indices = @transform_3, window_bounds = array<i64: 128, 128>}, {pipeline_mode = #tpu.pipeline_mode<synchronous>, transform_indices = @transform_4, window_bounds = array<i64: 1, 128>}, {transform_indices = @transform_5, window_bounds = array<i64: 8, 128>}]} {
    %c0 = arith.constant 0 : index
    %c0_0 = arith.constant 0 : index
    %0 = vector.load %arg1[%c0, %c0_0] : memref<8x128xf32, #tpu.memory_space<vmem>>, vector<8x128xf32>
    %c0_1 = arith.constant 0 : index
    %c0_2 = arith.constant 0 : index
    %1 = vector.load %arg2[%c0_1, %c0_2] : memref<128x128xf32, #tpu.memory_space<vmem>>, vector<128x128xf32>
    %c0_3 = arith.constant 0 : index
    %c0_4 = arith.constant 0 : index
    %2 = vector.load %arg3[%c0_3, %c0_4] : memref<1x128xf32, #tpu.memory_space<vmem>>, vector<1x128xf32>
    %cst = arith.constant dense<0.000000e+00> : vector<8x128xf32>
    %3 = tpu.matmul %0, %1, %cst {dimension_numbers = #tpu.dot_dimension_numbers<[1], [0], [0], [1], [0, 0, 1, 1], [], []>} : vector<8x128xf32>, vector<128x128xf32>, vector<8x128xf32> -> vector<8x128xf32>
    %4 = vector.broadcast %2 : vector<1x128xf32> to vector<8x128xf32>
    %5 = arith.addf %3, %4 : vector<8x128xf32>
    %cst_5 = arith.constant 0.000000e+00 : f32
    %6 = vector.broadcast %cst_5 : f32 to vector<8x128xf32>
    %7 = arith.maximumf %5, %6 : vector<8x128xf32>
    %c0_6 = arith.constant 0 : index
    %c0_7 = arith.constant 0 : index
    %8 = vector.load %arg4[%c0_6, %c0_7] : memref<128x128xf32, #tpu.memory_space<vmem>>, vector<128x128xf32>
    %c0_8 = arith.constant 0 : index
    %c0_9 = arith.constant 0 : index
    %9 = vector.load %arg5[%c0_8, %c0_9] : memref<1x128xf32, #tpu.memory_space<vmem>>, vector<1x128xf32>
    %cst_10 = arith.constant dense<0.000000e+00> : vector<8x128xf32>
    %10 = tpu.matmul %7, %8, %cst_10 {dimension_numbers = #tpu.dot_dimension_numbers<[1], [0], [0], [1], [0, 0, 1, 1], [], []>} : vector<8x128xf32>, vector<128x128xf32>, vector<8x128xf32> -> vector<8x128xf32>
    %11 = vector.broadcast %9 : vector<1x128xf32> to vector<8x128xf32>
    %12 = arith.addf %10, %11 : vector<8x128xf32>
    %cst_11 = arith.constant 0.000000e+00 : f32
    %13 = vector.broadcast %cst_11 : f32 to vector<8x128xf32>
    %14 = arith.maximumf %12, %13 : vector<8x128xf32>
    %c0_12 = arith.constant 0 : index
    %c0_13 = arith.constant 0 : index
    %15 = vector.load %arg6[%c0_12, %c0_13] : memref<8x128xf32, #tpu.memory_space<vmem>>, vector<8x128xf32>
    tpu.vector_store %arg6[%c0_12, %c0_13], %14 {strides = array<i32>} : memref<8x128xf32, #tpu.memory_space<vmem>>, vector<8x128xf32>,
    return
  }
  func.func @transform_0(%arg0: i32) -> (i32, i32) {
    %c0_i32 = arith.constant 0 : i32
    %c0_i32_0 = arith.constant 0 : i32
    return %arg0, %c0_i32 : i32, i32
  }
  func.func @transform_1(%arg0: i32) -> (i32, i32) {
    %c0_i32 = arith.constant 0 : i32
    %c0_i32_0 = arith.constant 0 : i32
    %c0_i32_1 = arith.constant 0 : i32
    return %c0_i32, %c0_i32_0 : i32, i32
  }
  func.func @transform_2(%arg0: i32) -> (i32, i32) {
    %c0_i32 = arith.constant 0 : i32
    %c0_i32_0 = arith.constant 0 : i32
    %c0_i32_1 = arith.constant 0 : i32
    return %c0_i32, %c0_i32_0 : i32, i32
  }
  func.func @transform_3(%arg0: i32) -> (i32, i32) {
    %c0_i32 = arith.constant 0 : i32
    %c0_i32_0 = arith.constant 0 : i32
    %c0_i32_1 = arith.constant 0 : i32
    return %c0_i32, %c0_i32_0 : i32, i32
  }
  func.func @transform_4(%arg0: i32) -> (i32, i32) {
    %c0_i32 = arith.constant 0 : i32
    %c0_i32_0 = arith.constant 0 : i32
    %c0_i32_1 = arith.constant 0 : i32
    return %c0_i32, %c0_i32_0 : i32, i32
  }
  func.func @transform_5(%arg0: i32) -> (i32, i32) {
    %c0_i32 = arith.constant 0 : i32
    %c0_i32_0 = arith.constant 0 : i32
    return %arg0, %c0_i32 : i32, i32
  }
}

</mosaic_0001>

<llo_original>
// kernel: decoder_forward.1
$region0: #{decoder_forward.1}
  #allocation0 [shape = 'u32[]', space=smem, size = 0x4, offset = 0x4, fixed_abs, tag = 'smem constant byte address 0x4 - core index']
  #allocation1 [shape = 'u32[144,128]{1,0:T(1,128)}', space=vmem, size = 0x12000, scoped, tag = 'internal scratch']
  %s0 = inlined_call_operand.vmem [shape: f32[8,128], index: 0, kind: input, shape index: {}]
  %s1 = inlined_call_operand.vmem [shape: f32[128,128], index: 1, kind: input, shape index: {}]
  %s2 = inlined_call_operand.vmem [shape: f32[1,128], index: 2, kind: input, shape index: {}]
  %s3 = inlined_call_operand.vmem [shape: f32[128,128], index: 3, kind: input, shape index: {}]
  %s4 = inlined_call_operand.vmem [shape: f32[1,128], index: 4, kind: input, shape index: {}]
  %s5 = inlined_call_operand.vmem [shape: f32[8,128], index: 5, kind: output, shape index: {}]
  %s6 = sld [smem:[#allocation0]]
  $region30: #{decoder_forward.1} parent=0
    _
  %s8 = ssub.s32 1, %s6
  %s9 = scalar_select 0, %s8, %s6
  // Predicated region
  $region2: #{decoder_forward.1} parent=0 // pred_check
    _
  $region3: #{decoder_forward.1} parent=0 // pred_check_branch
    %11 = sbr.rel (0) target = $region5
  $region4: #{decoder_forward.1} parent=0 // pred_region
    _
  $region5: #{decoder_forward.1} parent=0 // pred_fallthru
    _
  // Predicated region
  $region6: #{decoder_forward.1} parent=0 // pred_check
    _
  $region7: #{decoder_forward.1} parent=0 // pred_check_branch
    %13 = sbr.rel (0) target = $region9
  $region8: #{decoder_forward.1} parent=0 // pred_region
    _
  $region9: #{decoder_forward.1} parent=0 // pred_fallthru
    _
  // Predicated region
  $region10: #{decoder_forward.1} parent=0 // pred_check
    _
  $region11: #{decoder_forward.1} parent=0 // pred_check_branch
    %15 = sbr.rel (0) target = $region13
  $region12: #{decoder_forward.1} parent=0 // pred_region
    _
  $region13: #{decoder_forward.1} parent=0 // pred_fallthru
    _
  // Predicated region
  $region14: #{decoder_forward.1} parent=0 // pred_check
    _
  $region15: #{decoder_forward.1} parent=0 // pred_check_branch
    %17 = sbr.rel (0) target = $region17
  $region16: #{decoder_forward.1} parent=0 // pred_region
    _
  $region17: #{decoder_forward.1} parent=0 // pred_fallthru
    _
  // Predicated region
  $region18: #{decoder_forward.1} parent=0 // pred_check
    _
  $region19: #{decoder_forward.1} parent=0 // pred_check_branch
    %19 = sbr.rel (0) target = $region21
  $region20: #{decoder_forward.1} parent=0 // pred_region
    _
  $region21: #{decoder_forward.1} parent=0 // pred_fallthru
    _
  %v20 = vld [vmem:[%s0] sm:$0xff]
  %v21 = vld [vmem:[%s1] sm:$0xff]
  %v22 = vld [vmem:[%s1 + $0x8] sm:$0xff]
  %v23 = vld [vmem:[%s1 + $0x10] sm:$0xff]
  %v24 = vld [vmem:[%s1 + $0x18] sm:$0xff]
  %v25 = vld [vmem:[%s1 + $0x20] sm:$0xff]
  %v26 = vld [vmem:[%s1 + $0x28] sm:$0xff]
  %v27 = vld [vmem:[%s1 + $0x30] sm:$0xff]
  %v28 = vld [vmem:[%s1 + $0x38] sm:$0xff]
  %v29 = vld [vmem:[%s1 + $0x40] sm:$0xff]
  %v30 = vld [vmem:[%s1 + $0x48] sm:$0xff]
  %v31 = vld [vmem:[%s1 + $0x50] sm:$0xff]
  %v32 = vld [vmem:[%s1 + $0x58] sm:$0xff]
  %v33 = vld [vmem:[%s1 + $0x60] sm:$0xff]
  %v34 = vld [vmem:[%s1 + $0x68] sm:$0xff]
  %v35 = vld [vmem:[%s1 + $0x70] sm:$0xff]
  %v36 = vld [vmem:[%s1 + $0x78] sm:$0xff]
  %v37 = vld [vmem:[%s2] sm:$0x1]
  %v39 = vlaneseq
  %v40 = vshrl.u32 %v39, 7
  %v41 = vsub.s32 0, %v40
  %v42 = vrot.slane %v37, %v41
  %44 = vmatprep.subr.mxu0 0.0
  %45 = vmatpush1.msra.mxu0 %v36
  %46 = vmatprep.subr.mxu0 0.0
  %47 = vmatpush1.msra.mxu0 %v35
  %48 = vmatprep.subr.mxu0 0.0
  %49 = vmatpush1.msra.mxu0 %v34
  %50 = vmatprep.subr.mxu0 0.0
  %51 = vmatpush1.msra.mxu0 %v33
  %52 = vmatprep.subr.mxu0 0.0
  %53 = vmatpush1.msra.mxu0 %v32
  %54 = vmatprep.subr.mxu0 0.0
  %55 = vmatpush1.msra.mxu0 %v31
  %56 = vmatprep.subr.mxu0 0.0
  %57 = vmatpush1.msra.mxu0 %v30
  %58 = vmatprep.subr.mxu0 0.0
  %59 = vmatpush1.msra.mxu0 %v29
  %60 = vmatprep.subr.mxu0 0.0
  %61 = vmatpush1.msra.mxu0 %v28
  %62 = vmatprep.subr.mxu0 0.0
  %63 = vmatpush1.msra.mxu0 %v27
  %64 = vmatprep.subr.mxu0 0.0
  %65 = vmatpush1.msra.mxu0 %v26
  %66 = vmatprep.subr.mxu0 0.0
  %67 = vmatpush1.msra.mxu0 %v25
  %68 = vmatprep.subr.mxu0 0.0
  %69 = vmatpush1.msra.mxu0 %v24
  %70 = vmatprep.subr.mxu0 0.0
  %71 = vmatpush1.msra.mxu0 %v23
  %72 = vmatprep.subr.mxu0 0.0
  %73 = vmatpush1.msra.mxu0 %v22
  %74 = vmatprep.subr.mxu0 0.0
  %75 = vmatpush1.msra.mxu0 %v21
  %76 = vmatprep.subr.mxu0 0.0
  %77 = vmatpush2.msra.mxu0 0.0
  %78 = vmatprep.subr.mxu0 0.0
  %79 = vmatpush2.msra.mxu0 0.0
  %80 = vmatprep.subr.mxu0 0.0
  %81 = vmatpush2.msra.mxu0 0.0
  %82 = vmatprep.subr.mxu0 0.0
  %83 = vmatpush2.msra.mxu0 0.0
  %84 = vmatprep.subr.mxu0 0.0
  %85 = vmatpush2.msra.mxu0 0.0
  %86 = vmatprep.subr.mxu0 0.0
  %87 = vmatpush2.msra.mxu0 0.0
  %88 = vmatprep.subr.mxu0 0.0
  %89 = vmatpush2.msra.mxu0 0.0
  %90 = vmatprep.subr.mxu0 0.0
  %91 = vmatpush2.msra.mxu0 0.0
  %92 = vmatprep.subr.mxu0 0.0
  %93 = vmatpush2.msra.mxu0 0.0
  %94 = vmatprep.subr.mxu0 0.0
  %95 = vmatpush2.msra.mxu0 0.0
  %96 = vmatprep.subr.mxu0 0.0
  %97 = vmatpush2.msra.mxu0 0.0
  %98 = vmatprep.subr.mxu0 0.0
  %99 = vmatpush2.msra.mxu0 0.0
  %100 = vmatprep.subr.mxu0 0.0
  %101 = vmatpush2.msra.mxu0 0.0
  %102 = vmatprep.subr.mxu0 0.0
  %103 = vmatpush2.msra.mxu0 0.0
  %104 = vmatprep.subr.mxu0 0.0
  %105 = vmatpush2.msra.mxu0 0.0
  %106 = vmatprep.subr.mxu0 0.0
  %107 = vmatpush2.msra.mxu0 0.0
  %108 = vmatprep.mubr.f32.mxu0 0.0
  %109 = vmatmul.mubr.f32.gmra.mxu0 %v20
  %v110 = vpop.f32.mrf.mxu0
  %v111 = vadd.f32 %v42, %v110
  %v112 = vpop.f32.mrf.mxu0
  %113 = vdwg.mxu0
  %v114 = vmax.f32 %v111, 0.0
  %v115 = vld [vmem:[%s3] sm:$0xff]
  %v116 = vld [vmem:[%s3 + $0x8] sm:$0xff]
  %v117 = vld [vmem:[%s3 + $0x10] sm:$0xff]
  %v118 = vld [vmem:[%s3 + $0x18] sm:$0xff]
  %v119 = vld [vmem:[%s3 + $0x20] sm:$0xff]
  %v120 = vld [vmem:[%s3 + $0x28] sm:$0xff]
  %v121 = vld [vmem:[%s3 + $0x30] sm:$0xff]
  %v122 = vld [vmem:[%s3 + $0x38] sm:$0xff]
  %v123 = vld [vmem:[%s3 + $0x40] sm:$0xff]
  %v124 = vld [vmem:[%s3 + $0x48] sm:$0xff]
  %v125 = vld [vmem:[%s3 + $0x50] sm:$0xff]
  %v126 = vld [vmem:[%s3 + $0x58] sm:$0xff]
  %v127 = vld [vmem:[%s3 + $0x60] sm:$0xff]
  %v128 = vld [vmem:[%s3 + $0x68] sm:$0xff]
  %v129 = vld [vmem:[%s3 + $0x70] sm:$0xff]
  %v130 = vld [vmem:[%s3 + $0x78] sm:$0xff]
  %v131 = vld [vmem:[%s4] sm:$0x1]
  %v133 = vlaneseq
  %v134 = vshrl.u32 %v133, 7
  %v135 = vsub.s32 0, %v134
  %v136 = vrot.slane %v131, %v135
  %138 = vmatprep.subr.mxu0 0.0
  %139 = vmatpush1.msra.mxu0 %v130
  %140 = vmatprep.subr.mxu0 0.0
  %141 = vmatpush1.msra.mxu0 %v129
  %142 = vmatprep.subr.mxu0 0.0
  %143 = vmatpush1.msra.mxu0 %v128
  %144 = vmatprep.subr.mxu0 0.0
  %145 = vmatpush1.msra.mxu0 %v127
  %146 = vmatprep.subr.mxu0 0.0
  %147 = vmatpush1.msra.mxu0 %v126
  %148 = vmatprep.subr.mxu0 0.0
  %149 = vmatpush1.msra.mxu0 %v125
  %150 = vmatprep.subr.mxu0 0.0
  %151 = vmatpush1.msra.mxu0 %v124
  %152 = vmatprep.subr.mxu0 0.0
  %153 = vmatpush1.msra.mxu0 %v123
  %154 = vmatprep.subr.mxu0 0.0
  %155 = vmatpush1.msra.mxu0 %v122
  %156 = vmatprep.subr.mxu0 0.0
  %157 = vmatpush1.msra.mxu0 %v121
  %158 = vmatprep.subr.mxu0 0.0
  %159 = vmatpush1.msra.mxu0 %v120
  %160 = vmatprep.subr.mxu0 0.0
  %161 = vmatpush1.msra.mxu0 %v119
  %162 = vmatprep.subr.mxu0 0.0
  %163 = vmatpush1.msra.mxu0 %v118
  %164 = vmatprep.subr.mxu0 0.0
  %165 = vmatpush1.msra.mxu0 %v117
  %166 = vmatprep.subr.mxu0 0.0
  %167 = vmatpush1.msra.mxu0 %v116
  %168 = vmatprep.subr.mxu0 0.0
  %169 = vmatpush1.msra.mxu0 %v115
  %170 = vmatprep.subr.mxu0 0.0
  %171 = vmatpush2.msra.mxu0 0.0
  %172 = vmatprep.subr.mxu0 0.0
  %173 = vmatpush2.msra.mxu0 0.0
  %174 = vmatprep.subr.mxu0 0.0
  %175 = vmatpush2.msra.mxu0 0.0
  %176 = vmatprep.subr.mxu0 0.0
  %177 = vmatpush2.msra.mxu0 0.0
  %178 = vmatprep.subr.mxu0 0.0
  %179 = vmatpush2.msra.mxu0 0.0
  %180 = vmatprep.subr.mxu0 0.0
  %181 = vmatpush2.msra.mxu0 0.0
  %182 = vmatprep.subr.mxu0 0.0
  %183 = vmatpush2.msra.mxu0 0.0
  %184 = vmatprep.subr.mxu0 0.0
  %185 = vmatpush2.msra.mxu0 0.0
  %186 = vmatprep.subr.mxu0 0.0
  %187 = vmatpush2.msra.mxu0 0.0
  %188 = vmatprep.subr.mxu0 0.0
  %189 = vmatpush2.msra.mxu0 0.0
  %190 = vmatprep.subr.mxu0 0.0
  %191 = vmatpush2.msra.mxu0 0.0
  %192 = vmatprep.subr.mxu0 0.0
  %193 = vmatpush2.msra.mxu0 0.0
  %194 = vmatprep.subr.mxu0 0.0
  %195 = vmatpush2.msra.mxu0 0.0
  %196 = vmatprep.subr.mxu0 0.0
  %197 = vmatpush2.msra.mxu0 0.0
  %198 = vmatprep.subr.mxu0 0.0
  %199 = vmatpush2.msra.mxu0 0.0
  %200 = vmatprep.subr.mxu0 0.0
  %201 = vmatpush2.msra.mxu0 0.0
  %202 = vmatprep.mubr.f32.mxu0 0.0
  %203 = vmatmul.mubr.f32.gmra.mxu0 %v114
  %v204 = vpop.f32.mrf.mxu0
  %v205 = vadd.f32 %v136, %v204
  %v206 = vpop.f32.mrf.mxu0
  %207 = vdwg.mxu0
  %v208 = vmax.f32 %v205, 0.0
  %209 = vst [vmem:[%s5] sm:$0xff] %v208
  // Predicated region
  $region22: #{decoder_forward.1} parent=0 // pred_check
    _
  $region23: #{decoder_forward.1} parent=0 // pred_check_branch
    %211 = sbr.rel (0) target = $region25
  $region24: #{decoder_forward.1} parent=0 // pred_region
    _
  $region25: #{decoder_forward.1} parent=0 // pred_fallthru
    _
  // Predicated region
  $region26: #{decoder_forward.1} parent=0 // pred_check
    _
  $region27: #{decoder_forward.1} parent=0 // pred_check_branch
    %213 = sbr.rel (0) target = $region29
  $region28: #{decoder_forward.1} parent=0 // pred_region
    _
  $region29: #{decoder_forward.1} parent=0 // pred_fallthru
    _

</llo_original>
